<compile_context>
chip_gen: v5e
topology: v5e:2x2
jax: 0.10.0
libtpu: 0.0.40
codegen_flags: <defaults>
</compile_context>

<pallas_src>
import jax
import jax.numpy as jnp
from jax import lax
from jax.experimental import pallas as pl
from jax.experimental.pallas import tpu as pltpu


def _sigmoid(z):
    # Exact sigmoid via tanh: one EUP op + one VPU fma; no overflow path and
    # accurate to f32 roundoff (unlike the approx-reciprocal formulation).
    return 0.5 * jnp.tanh(0.5 * z) + 0.5


def _logreg_o1_kernel(x_ref, w_ref, o_ref):
    # O == 1 path, lane-dense output: (1, F) . (tb, F)^T -> (1, tb) on the
    # MXU.  Output row is lane-major -> unmasked vst.
    z = lax.dot_general(
        w_ref[...], x_ref[...],
        dimension_numbers=(((1,), (1,)), ((), ())),
        preferred_element_type=jnp.float32,
    )                                                  # (1, tb) f32
    o_ref[...] = _sigmoid(z).astype(o_ref.dtype)


def _logreg_general_kernel(x_ref, wt_ref, o_ref):
    # General-O path: standard (tb, F) @ (F, O) matmul; weight arrives
    # pre-transposed, so no per-step XLU transpose of the resident block.
    z = jnp.dot(x_ref[...], wt_ref[...], preferred_element_type=jnp.float32)
    o_ref[...] = _sigmoid(z).astype(o_ref.dtype)


def _pick_batch_tile(B, F, itemsize, *, x_block_bytes=4 << 20,
                     vmem_budget_bytes=40 << 20):
    """Pick a batch tile by byte budget.

    Targets ~x_block_bytes of x per grid step (so per-step pipeline overhead
    is amortized), capped so 2x double-buffered x blocks stay under a VMEM
    budget that is safe on v7x (64 MiB physical).  When tiling, tb is a
    multiple of 128 so both the (tb, F) sublane constraint and the lane-dense
    (1, tb) output block constraint hold; tb == B uses the full-array
    exemption.
    """
    bytes_per_row = max(1, F * itemsize)
    tb = x_block_bytes // bytes_per_row
    tb = min(tb, vmem_budget_bytes // (2 * bytes_per_row))
    tb = max(128, (tb // 128) * 128)
    if tb >= B:
        return B, 1
    return tb, pl.cdiv(B, tb)


def logreg_forward(x, weight, *, x_block_bytes=4 << 20):
    """LogReg forward: sigmoid(x @ weight.T).

    x:      (B, n_feature)
    weight: (n_output, n_feature)  (torch nn.Linear layout, bias=False)
    Returns (B, n_output) float32.
    """
    B, F = x.shape
    O, F2 = weight.shape
    assert F == F2, "feature dim mismatch"

    tb, steps = _pick_batch_tile(B, F, x.dtype.itemsize,
                                 x_block_bytes=x_block_bytes)
    grid = (steps,)

    compiler_params = pltpu.CompilerParams(
        # Batch tiles are independent -> shard across both TCs on v7x
        # (no-op on v5e/v6e or when the grid has a single step).
        dimension_semantics=("parallel",),
        # Raise the scoped-VMEM limit above the v5e 16 MiB / v6e-v7x 32 MiB
        # defaults so the byte-budget tiles always compile; stays under
        # v7x's 64 MiB physical VMEM.
        vmem_limit_bytes=48 << 20,
    )

    if O == 1:
        out = pl.pallas_call(
            _logreg_o1_kernel,
            out_shape=jax.ShapeDtypeStruct((1, B), jnp.float32),
            grid_spec=pltpu.PrefetchScalarGridSpec(
                num_scalar_prefetch=0,
                grid=grid,
                in_specs=[
                    pl.BlockSpec((tb, F), lambda i: (i, 0)),  # x tile / step
                    pl.BlockSpec((1, F), lambda i: (0, 0)),   # weight resident
                ],
                out_specs=pl.BlockSpec((1, tb), lambda i: (0, i)),  # lane-dense
            ),
            compiler_params=compiler_params,
        )(x, weight)
        return out.reshape(B, 1)  # (1, B) -> (B, 1): free for O == 1

    # General O: pre-transpose the weight once (tiny one-time op) so the
    # kernel contracts (F) against the leading dim of a (F, O) block.
    wt = weight.T
    return pl.pallas_call(
        _logreg_general_kernel,
        out_shape=jax.ShapeDtypeStruct((B, O), jnp.float32),
        grid_spec=pltpu.PrefetchScalarGridSpec(
            num_scalar_prefetch=0,
            grid=grid,
            in_specs=[
                pl.BlockSpec((tb, F), lambda i: (i, 0)),      # x tile / step
                pl.BlockSpec((F, O), lambda i: (0, 0)),       # weight resident
            ],
            out_specs=pl.BlockSpec((tb, O), lambda i: (i, 0)),
        ),
        compiler_params=compiler_params,
    )(x, wt)


if __name__ == "__main__":
    key = jax.random.PRNGKey(0)
    kx, kw, kw2 = jax.random.split(key, 3)

    B = 8          # batch
    n_feature = 32
    n_output = 1

    x = jax.random.normal(kx, (B, n_feature), dtype=jnp.float32)
    # Deterministic init mimicking torch.nn.Linear default (uniform +-1/sqrt(fan_in)).
    bound = 1.0 / jnp.sqrt(jnp.float32(n_feature))
    weight = jax.random.uniform(
        kw, (n_output, n_feature), dtype=jnp.float32, minval=-bound, maxval=bound
    )

    out = jax.block_until_ready(logreg_forward(x, weight))
    ref = jax.nn.sigmoid(x @ weight.T)
    assert out.shape == (B, n_output)
    assert jnp.allclose(out, ref, atol=1e-5, rtol=1e-5)

    # Also exercise the general-O (pre-transposed weight, MXU) path.
    n_output2 = 4
    weight2 = jax.random.uniform(
        kw2, (n_output2, n_feature), dtype=jnp.float32, minval=-bound, maxval=bound
    )
    out2 = jax.block_until_ready(logreg_forward(x, weight2))
    ref2 = jax.nn.sigmoid(x @ weight2.T)
    assert out2.shape == (B, n_output2)
    assert jnp.allclose(out2, ref2, atol=1e-5, rtol=1e-5)

    print("KERNEL_OK")
</pallas_src>

<mosaic_0001>
module attributes {stable_mosaic.version = 11 : i64} {
  func.func @_logreg_o1_kernel(%arg0: i32, %arg1: memref<8x32xf32, #tpu.memory_space<vmem>>, %arg2: memref<1x32xf32, #tpu.memory_space<vmem>>, %arg3: memref<1x8xf32, #tpu.memory_space<vmem>>) attributes {dimension_semantics = [#tpu.dimension_semantics<parallel>], iteration_bounds = array<i64: 1>, scalar_prefetch = 0 : i64, scratch_operands = 0 : i64, tpu.core_type = #tpu.core_type<tc>, window_params = [{transform_indices = @transform_0, window_bounds = array<i64: 8, 32>}, {pipeline_mode = #tpu.pipeline_mode<synchronous>, transform_indices = @transform_1, window_bounds = array<i64: 1, 32>}, {transform_indices = @transform_2, window_bounds = array<i64: 1, 8>}]} {
    %c0 = arith.constant 0 : index
    %c0_0 = arith.constant 0 : index
    %0 = vector.load %arg2[%c0, %c0_0] : memref<1x32xf32, #tpu.memory_space<vmem>>, vector<1x32xf32>
    %c0_1 = arith.constant 0 : index
    %c0_2 = arith.constant 0 : index
    %1 = vector.load %arg1[%c0_1, %c0_2] : memref<8x32xf32, #tpu.memory_space<vmem>>, vector<8x32xf32>
    %cst = arith.constant dense<0.000000e+00> : vector<1x8xf32>
    %2 = tpu.matmul %0, %1, %cst {dimension_numbers = #tpu.dot_dimension_numbers<[1], [1], [0], [0], [0, 0, 1, 0], [], []>} : vector<1x32xf32>, vector<8x32xf32>, vector<1x8xf32> -> vector<1x8xf32>
    %cst_3 = arith.constant 5.000000e-01 : f32
    %3 = vector.broadcast %cst_3 : f32 to vector<1x8xf32>
    %4 = arith.mulf %3, %2 : vector<1x8xf32>
    %5 = math.tanh %4 : vector<1x8xf32>
    %cst_4 = arith.constant 5.000000e-01 : f32
    %6 = vector.broadcast %cst_4 : f32 to vector<1x8xf32>
    %7 = arith.mulf %6, %5 : vector<1x8xf32>
    %cst_5 = arith.constant 5.000000e-01 : f32
    %8 = vector.broadcast %cst_5 : f32 to vector<1x8xf32>
    %9 = arith.addf %7, %8 : vector<1x8xf32>
    %c0_6 = arith.constant 0 : index
    %c0_7 = arith.constant 0 : index
    %10 = vector.load %arg3[%c0_6, %c0_7] : memref<1x8xf32, #tpu.memory_space<vmem>>, vector<1x8xf32>
    tpu.vector_store %arg3[%c0_6, %c0_7], %9 {strides = array<i32>} : memref<1x8xf32, #tpu.memory_space<vmem>>, vector<1x8xf32>,
    return
  }
  func.func @transform_0(%arg0: i32) -> (i32, i32) {
    %c0_i32 = arith.constant 0 : i32
    %c0_i32_0 = arith.constant 0 : i32
    return %arg0, %c0_i32 : i32, i32
  }
  func.func @transform_1(%arg0: i32) -> (i32, i32) {
    %c0_i32 = arith.constant 0 : i32
    %c0_i32_0 = arith.constant 0 : i32
    %c0_i32_1 = arith.constant 0 : i32
    return %c0_i32, %c0_i32_0 : i32, i32
  }
  func.func @transform_2(%arg0: i32) -> (i32, i32) {
    %c0_i32 = arith.constant 0 : i32
    %c0_i32_0 = arith.constant 0 : i32
    return %c0_i32, %arg0 : i32, i32
  }
}

</mosaic_0001>

<llo_original>
// kernel: tpu_custom_call.1
$region0: #{tpu_custom_call.1}
  #allocation0 [shape = 'u32[]', space=smem, size = 0x4, offset = 0x4, fixed_abs, tag = 'smem constant byte address 0x4 - core index']
  #allocation1 [shape = 'u32[72,128]{1,0:T(1,128)}', space=vmem, size = 0x9000, scoped, tag = 'internal scratch']
  %s0 = inlined_call_operand.hbm [shape: f32[8,32], index: 0, kind: input, shape index: {}]
  %s1 = inlined_call_operand.hbm [shape: f32[1,32], index: 1, kind: input, shape index: {}]
  %s2 = inlined_call_operand.hbm [shape: f32[1,8], index: 2, kind: output, shape index: {}]
  %s3 = sld [smem:[#allocation0]]
  $region26: #{tpu_custom_call.1} parent=0
    _
  %s5 = ssub.s32 1, %s3
  %s6 = scalar_select 0, %s5, %s3
  $region1: #{tpu_custom_call.1} parent=0
    #allocation2 [shape = 'u8[4096]{0}', space=vmem, size = 0x1000, scoped, tag = 'input window, operand 0, single buffered']
    #allocation3 [shape = 's32[1]{0}', space=sflag, size = 0x4, scoped, tag = 'scoped memory for tpu_custom_call.1']
    #allocation4 [shape = 's32[1]{0}', space=sflag, size = 0x4, scoped, tag = 'scoped memory for tpu_custom_call.1']
    #allocation5 [shape = 'u8[512]{0}', space=vmem, size = 0x400, scoped, tag = 'input window, operand 1, single buffered']
    #allocation6 [shape = 's32[1]{0}', space=sflag, size = 0x4, scoped, tag = 'scoped memory for tpu_custom_call.1']
    #allocation7 [shape = 'u8[512]{0}', space=vmem, size = 0x400, scoped, tag = 'output window, operand 0, single buffered']
    %7 = vsyncpa [#allocation3], 0
    %8 = vsyncpa [#allocation6], 0
    %9 = vsyncpa [#allocation4], 0
    // Predicated region
    $region2: #{tpu_custom_call.1} parent=1 // pred_check
      _
    $region3: #{tpu_custom_call.1} parent=1 // pred_check_branch
      %11 = sbr.rel (0) target = $region5
    $region4: #{tpu_custom_call.1} parent=1 // pred_region
      %13 = vsyncadd [#allocation3], 0
      %s15 = sshll.u32 %s0, 4
      %s16 = int_to_ptr.hbm [resolvable:$true] %s15
      %s17 = sshll.u32 [#allocation2], 4
      %s18 = int_to_ptr.vmem [resolvable:$true] %s17
      %20 = dma.hbm_to_vmem [thread:$0]  %s16, 128, %s18, [#allocation3]
    $region5: #{tpu_custom_call.1} parent=1 // pred_fallthru
      _
    // Predicated region
    $region6: #{tpu_custom_call.1} parent=1 // pred_check
      _
    $region7: #{tpu_custom_call.1} parent=1 // pred_check_branch
      %22 = sbr.rel (0) target = $region9
    $region8: #{tpu_custom_call.1} parent=1 // pred_region
      %24 = vsyncadd [#allocation6], 0
      %s26 = sshll.u32 %s1, 4
      %s27 = int_to_ptr.hbm [resolvable:$true] %s26
      %s28 = sshll.u32 [#allocation5], 4
      %s29 = int_to_ptr.vmem [resolvable:$true] %s28
      %31 = dma.hbm_to_vmem [thread:$0]  %s27, 16, %s29, [#allocation6]
    $region9: #{tpu_custom_call.1} parent=1 // pred_fallthru
      _
    // Predicated region
    $region10: #{tpu_custom_call.1} parent=1 // pred_check
      _
    $region11: #{tpu_custom_call.1} parent=1 // pred_check_branch
      %33 = sbr.rel (0) target = $region13
    $region12: #{tpu_custom_call.1} parent=1 // pred_region
      %35 = dma.done [#allocation3], 128
    $region13: #{tpu_custom_call.1} parent=1 // pred_fallthru
      _
    // Predicated region
    $region14: #{tpu_custom_call.1} parent=1 // pred_check
      _
    $region15: #{tpu_custom_call.1} parent=1 // pred_check_branch
      %37 = sbr.rel (0) target = $region17
    $region16: #{tpu_custom_call.1} parent=1 // pred_region
      %39 = dma.done [#allocation6], 16
    $region17: #{tpu_custom_call.1} parent=1 // pred_fallthru
      _
    %v40 = vld [vmem:[#allocation5] sm:$0x1]
    %v41 = vld [vmem:[#allocation2] sm:$0xff]
    %vm42 = vcmask 261120
    %v44 = vsel %vm42, %v40, 0
    %v47 = vsel %vm42, %v41, 0
    %49 = vmatpush.xpose.msra.mxu0 0.0
    %50 = vmatpush.xpose.msra.mxu0 0.0
    %51 = vmatpush.xpose.msra.mxu0 0.0
    %52 = vmatpush.xpose.msra.mxu0 0.0
    %53 = vmatpush.xpose.msra.mxu0 0.0
    %54 = vmatpush.xpose.msra.mxu0 0.0
    %55 = vmatpush.xpose.msra.mxu0 0.0
    %56 = vmatpush.xpose.msra.mxu0 0.0
    %57 = vmatpush.xpose.msra.mxu0 0.0
    %58 = vmatpush.xpose.msra.mxu0 0.0
    %59 = vmatpush.xpose.msra.mxu0 0.0
    %60 = vmatpush.xpose.msra.mxu0 0.0
    %61 = vmatpush.xpose.msra.mxu0 0.0
    %62 = vmatpush.xpose.msra.mxu0 0.0
    %63 = vmatpush.xpose.msra.mxu0 0.0
    %64 = vmatpush.xpose.msra.mxu0 %v47
    %65 = vmatmul.f32.gmra.mxu0 %v44
    %v66 = vpop.f32.mrf.mxu0
    %v67 = vadd.f32 0.0, %v66
    %68 = vdwg.mxu0
    %v69 = vmul.f32 %v67, 0.5
    %v70 = vtanh.pop %v69
    %v71 = vmul.f32 %v70, 0.5
    %v72 = vadd.f32 %v71, 0.5
    %vm73 = vcmask 57344
    %74 = vst.msk [vmem:[#allocation7] sm:$0x1] %vm73, %v72
    // Predicated region
    $region18: #{tpu_custom_call.1} parent=1 // pred_check
      _
    $region19: #{tpu_custom_call.1} parent=1 // pred_check_branch
      %76 = sbr.rel (0) target = $region21
    $region20: #{tpu_custom_call.1} parent=1 // pred_region
      %78 = vsyncadd [#allocation4], 0
      %s80 = sshll.u32 [#allocation7], 4
      %s81 = int_to_ptr.vmem [resolvable:$true] %s80
      %s82 = sshll.u32 %s2, 4
      %s83 = int_to_ptr.hbm [resolvable:$true] %s82
      %85 = dma.vmem_to_hbm [thread:$0]  %s81, 16, %s83, [#allocation4]
    $region21: #{tpu_custom_call.1} parent=1 // pred_fallthru
      _
    // Predicated region
    $region22: #{tpu_custom_call.1} parent=1 // pred_check
      _
    $region23: #{tpu_custom_call.1} parent=1 // pred_check_branch
      %87 = sbr.rel (0) target = $region25
    $region24: #{tpu_custom_call.1} parent=1 // pred_region
      %89 = dma.done [#allocation4], 16
    $region25: #{tpu_custom_call.1} parent=1 // pred_fallthru
      _
    %90 = vsyncpa [#allocation3], 1
    %91 = vsyncpa [#allocation6], 1
    %92 = vsyncpa [#allocation4], 1

</llo_original>
